<compile_context>
chip_gen: v5e
topology: v5e:2x2
jax: 0.10.0
libtpu: 0.0.40
codegen_flags: <defaults>
</compile_context>

<pallas_src>
import functools

import jax
import jax.numpy as jnp
from jax.experimental import pallas as pl
from jax.experimental.pallas import tpu as pltpu


_TAPS = tuple((di, dj) for di in (-1, 0, 1) for dj in (-1, 0, 1))


def _conv_module_kernel(x_ref, w1_ref, m1_ref, w2_ref, m2_ref, o_ref, *,
                        W, eps, slope):
    C1, L = x_ref.shape
    Cout = o_ref.shape[0]
    C2 = w2_ref.shape[1] // 9

    def conv_bn_lrelu(x, wmat, mask):
        # im2col via 9 static circular lane rolls; the precomputed mask zeroes
        # every wrapped lane (image borders & sample boundaries).
        shifted = [x if (di == 0 and dj == 0)
                   else pltpu.roll(x, shift=(-(di * W + dj)) % L, axis=1)
                   for (di, dj) in _TAPS]
        patches = jnp.concatenate(shifted, axis=0) * mask        # (9C, L)

        # One lane-dense MXU GEMM per conv: (Cout, 9C) @ (9C, N*H*W).
        # (Inputs kept f32 to stay within the 1e-4 reference tolerance.)
        y = jnp.dot(wmat, patches, preferred_element_type=jnp.float32)

        # BatchNorm2d training forward (gamma=1, beta=0): single-pass
        # sum / sum-of-squares over the lane axis (= N*H*W elements/channel).
        inv = 1.0 / L
        mean = jnp.sum(y, axis=-1, keepdims=True) * inv          # (Cout, 1)
        ex2 = jnp.sum(y * y, axis=-1, keepdims=True) * inv       # (Cout, 1)
        var = jnp.maximum(ex2 - mean * mean, 0.0)
        yn = (y - mean) * jax.lax.rsqrt(var + eps)

        # LeakyReLU(0.2) as mul + max.
        return jnp.maximum(yn, slope * yn)

    h = conv_bn_lrelu(x_ref[...].astype(jnp.float32), w1_ref[...], m1_ref[...])
    if C2 != Cout:  # sublane-pad conv2 input channels (no-op when Cout % 8 == 0)
        h = jnp.concatenate([h, jnp.zeros((C2 - Cout, L), jnp.float32)], axis=0)
    out = conv_bn_lrelu(h, w2_ref[...], m2_ref[...])
    o_ref[...] = out.astype(o_ref.dtype)


def _tap_mask(N, H, W, C):
    """Tap-major / channel-minor (9*C, N*H*W) validity mask (constant-folded)."""
    S = H * W
    s = jnp.arange(N * S, dtype=jnp.int32) % S       # within-sample pixel index
    row = s // W
    col = s % W
    rows = []
    for (di, dj) in _TAPS:
        ok = ((row + di >= 0) & (row + di < H) &
              (col + dj >= 0) & (col + dj < W)).astype(jnp.float32)
        rows.append(jnp.broadcast_to(ok[None, :], (C, N * S)))
    return jnp.concatenate(rows, axis=0)


def conv_module_forward(x_nchw, params, *, eps=1e-5, slope=0.2):
    """convModule.forward (NCHW in / NCHW out), one fused Pallas call."""
    N, Cin, H, W = x_nchw.shape
    Cout = params["w1"].shape[-1]
    L = N * H * W

    def pad8(c):
        return ((c + 7) // 8) * 8

    C1, C2 = pad8(Cin), pad8(Cout)

    # NCHW -> (C, N*H*W): channels on sublanes, batch*spatial on lanes.
    x = jnp.transpose(x_nchw, (1, 0, 2, 3)).reshape(Cin, L)
    if C1 != Cin:
        x = jnp.concatenate([x, jnp.zeros((C1 - Cin, L), x.dtype)], axis=0)

    def wmat(w_hwio, cpad):
        kh, kw, ci, co = w_hwio.shape
        if cpad != ci:
            w_hwio = jnp.concatenate(
                [w_hwio, jnp.zeros((kh, kw, cpad - ci, co), w_hwio.dtype)],
                axis=2)
        # K is tap-major / channel-minor, matching the in-kernel patch stacking.
        return jnp.transpose(w_hwio, (3, 0, 1, 2)).reshape(co, kh * kw * cpad)

    w1m = wmat(params["w1"], C1)
    w2m = wmat(params["w2"], C2)
    # Conv biases (b1/b2) are intentionally omitted: training-mode BatchNorm
    # with gamma=1 / beta=0 subtracts the per-channel mean, cancelling them.

    m1 = _tap_mask(N, H, W, C1)
    m2 = m1 if C2 == C1 else _tap_mask(N, H, W, C2)

    kernel = functools.partial(_conv_module_kernel, W=W, eps=eps, slope=slope)
    y = pl.pallas_call(
        kernel,
        out_shape=jax.ShapeDtypeStruct((Cout, L), jnp.float32),
        grid=(1,),
        in_specs=[
            pl.BlockSpec((C1, L), lambda i: (0, 0)),
            pl.BlockSpec((Cout, 9 * C1), lambda i: (0, 0)),
            pl.BlockSpec((9 * C1, L), lambda i: (0, 0)),
            pl.BlockSpec((Cout, 9 * C2), lambda i: (0, 0)),
            pl.BlockSpec((9 * C2, L), lambda i: (0, 0)),
        ],
        out_specs=pl.BlockSpec((Cout, L), lambda i: (0, 0)),
        compiler_params=pltpu.CompilerParams(
            dimension_semantics=("arbitrary",),
            vmem_limit_bytes=32 * 1024 * 1024,  # usage <1 MiB; raise when tiling up
        ),
    )(x, w1m, m1, w2m, m2)

    # Free-ish reshape/transpose back to NCHW.
    return jnp.transpose(y.reshape(Cout, N, H, W), (1, 0, 2, 3))


def _reference(x_nchw, params, eps=1e-5, slope=0.2):
    """Pure-JAX reference (matches PyTorch training-mode forward, incl. biases)."""
    def block(x, w_hwio, b):
        y = jax.lax.conv_general_dilated(
            x, w_hwio, window_strides=(1, 1), padding="SAME",
            dimension_numbers=("NCHW", "HWIO", "NCHW"))
        y = y + b.reshape(1, -1, 1, 1)
        mean = jnp.mean(y, axis=(0, 2, 3), keepdims=True)
        var = jnp.mean((y - mean) ** 2, axis=(0, 2, 3), keepdims=True)
        y = (y - mean) * jax.lax.rsqrt(var + eps)
        return jnp.where(y >= 0, y, slope * y)

    h = block(x_nchw, params["w1"], params["b1"])
    return block(h, params["w2"], params["b2"])


if __name__ == "__main__":
    key = jax.random.PRNGKey(0)
    N, Cin, Cout, H, W = 2, 4, 8, 16, 16

    k1, k2, k3, k4, kx = jax.random.split(key, 5)
    # Deterministic init, PyTorch-Conv2d-style uniform bound = 1/sqrt(fan_in).
    bound1 = 1.0 / (Cin * 9) ** 0.5
    bound2 = 1.0 / (Cout * 9) ** 0.5
    params = {
        "w1": jax.random.uniform(k1, (3, 3, Cin, Cout), jnp.float32, -bound1, bound1),
        "b1": jax.random.uniform(k2, (Cout,), jnp.float32, -bound1, bound1),
        "w2": jax.random.uniform(k3, (3, 3, Cout, Cout), jnp.float32, -bound2, bound2),
        "b2": jax.random.uniform(k4, (Cout,), jnp.float32, -bound2, bound2),
    }
    x = jax.random.normal(kx, (N, Cin, H, W), jnp.float32)

    out = jax.jit(conv_module_forward)(x, params)
    out = jax.block_until_ready(out)

    ref = _reference(x, params)
    assert out.shape == (N, Cout, H, W)
    err = float(jnp.max(jnp.abs(out - ref)))
    assert jnp.allclose(out, ref, atol=1e-4, rtol=1e-4), err

    print("KERNEL_OK")
</pallas_src>

<mosaic_0001>
module attributes {stable_mosaic.version = 11 : i64} {
  func.func @_conv_module_kernel(%arg0: i32, %arg1: memref<8x512xf32, #tpu.memory_space<vmem>>, %arg2: memref<8x72xf32, #tpu.memory_space<vmem>>, %arg3: memref<72x512xf32, #tpu.memory_space<vmem>>, %arg4: memref<8x72xf32, #tpu.memory_space<vmem>>, %arg5: memref<72x512xf32, #tpu.memory_space<vmem>>, %arg6: memref<8x512xf32, #tpu.memory_space<vmem>>) attributes {dimension_semantics = [#tpu.dimension_semantics<arbitrary>], iteration_bounds = array<i64: 1>, scalar_prefetch = 0 : i64, scratch_operands = 0 : i64, tpu.core_type = #tpu.core_type<tc>, window_params = [{pipeline_mode = #tpu.pipeline_mode<synchronous>, transform_indices = @transform_0, window_bounds = array<i64: 8, 512>}, {pipeline_mode = #tpu.pipeline_mode<synchronous>, transform_indices = @transform_1, window_bounds = array<i64: 8, 72>}, {pipeline_mode = #tpu.pipeline_mode<synchronous>, transform_indices = @transform_2, window_bounds = array<i64: 72, 512>}, {pipeline_mode = #tpu.pipeline_mode<synchronous>, transform_indices = @transform_3, window_bounds = array<i64: 8, 72>}, {pipeline_mode = #tpu.pipeline_mode<synchronous>, transform_indices = @transform_4, window_bounds = array<i64: 72, 512>}, {pipeline_mode = #tpu.pipeline_mode<synchronous>, transform_indices = @transform_5, window_bounds = array<i64: 8, 512>}]} {
    %c0 = arith.constant 0 : index
    %c0_0 = arith.constant 0 : index
    %0 = vector.load %arg1[%c0, %c0_0] : memref<8x512xf32, #tpu.memory_space<vmem>>, vector<8x512xf32>
    %c0_1 = arith.constant 0 : index
    %c0_2 = arith.constant 0 : index
    %1 = vector.load %arg2[%c0_1, %c0_2] : memref<8x72xf32, #tpu.memory_space<vmem>>, vector<8x72xf32>
    %c0_3 = arith.constant 0 : index
    %c0_4 = arith.constant 0 : index
    %2 = vector.load %arg3[%c0_3, %c0_4] : memref<72x512xf32, #tpu.memory_space<vmem>>, vector<72x512xf32>
    %c17_i32 = arith.constant 17 : i32
    %3 = tpu.dynamic_rotate %0 by %c17_i32 dim 1 : vector<8x512xf32>, i32 -> vector<8x512xf32>
    %c16_i32 = arith.constant 16 : i32
    %4 = tpu.dynamic_rotate %0 by %c16_i32 dim 1 : vector<8x512xf32>, i32 -> vector<8x512xf32>
    %c15_i32 = arith.constant 15 : i32
    %5 = tpu.dynamic_rotate %0 by %c15_i32 dim 1 : vector<8x512xf32>, i32 -> vector<8x512xf32>
    %c1_i32 = arith.constant 1 : i32
    %6 = tpu.dynamic_rotate %0 by %c1_i32 dim 1 : vector<8x512xf32>, i32 -> vector<8x512xf32>
    %c511_i32 = arith.constant 511 : i32
    %7 = tpu.dynamic_rotate %0 by %c511_i32 dim 1 : vector<8x512xf32>, i32 -> vector<8x512xf32>
    %c497_i32 = arith.constant 497 : i32
    %8 = tpu.dynamic_rotate %0 by %c497_i32 dim 1 : vector<8x512xf32>, i32 -> vector<8x512xf32>
    %c496_i32 = arith.constant 496 : i32
    %9 = tpu.dynamic_rotate %0 by %c496_i32 dim 1 : vector<8x512xf32>, i32 -> vector<8x512xf32>
    %c495_i32 = arith.constant 495 : i32
    %10 = tpu.dynamic_rotate %0 by %c495_i32 dim 1 : vector<8x512xf32>, i32 -> vector<8x512xf32>
    %11 = tpu.concatenate %3, %4, %5, %6, %0, %7, %8, %9, %10 in 0 : vector<8x512xf32>, vector<8x512xf32>, vector<8x512xf32>, vector<8x512xf32>, vector<8x512xf32>, vector<8x512xf32>, vector<8x512xf32>, vector<8x512xf32>, vector<8x512xf32> -> vector<72x512xf32>
    %12 = arith.mulf %11, %2 : vector<72x512xf32>
    %cst = arith.constant dense<0.000000e+00> : vector<8x512xf32>
    %13 = tpu.matmul %1, %12, %cst {dimension_numbers = #tpu.dot_dimension_numbers<[1], [0], [0], [1], [0, 0, 1, 1], [], []>} : vector<8x72xf32>, vector<72x512xf32>, vector<8x512xf32> -> vector<8x512xf32>
    %cst_5 = arith.constant dense<0.000000e+00> : vector<8xf32>
    %14 = vector.multi_reduction <add>, %13, %cst_5 [1] : vector<8x512xf32> to vector<8xf32>
    %15 = vector.shape_cast %14 : vector<8xf32> to vector<8x1xf32>
    %cst_6 = arith.constant 0.001953125 : f32
    %16 = vector.broadcast %cst_6 : f32 to vector<8x1xf32>
    %17 = arith.mulf %15, %16 : vector<8x1xf32>
    %18 = arith.mulf %13, %13 : vector<8x512xf32>
    %cst_7 = arith.constant dense<0.000000e+00> : vector<8xf32>
    %19 = vector.multi_reduction <add>, %18, %cst_7 [1] : vector<8x512xf32> to vector<8xf32>
    %20 = vector.shape_cast %19 : vector<8xf32> to vector<8x1xf32>
    %cst_8 = arith.constant 0.001953125 : f32
    %21 = vector.broadcast %cst_8 : f32 to vector<8x1xf32>
    %22 = arith.mulf %20, %21 : vector<8x1xf32>
    %23 = arith.mulf %17, %17 : vector<8x1xf32>
    %24 = arith.subf %22, %23 : vector<8x1xf32>
    %cst_9 = arith.constant 0.000000e+00 : f32
    %25 = vector.broadcast %cst_9 : f32 to vector<8x1xf32>
    %26 = arith.maximumf %24, %25 : vector<8x1xf32>
    %27 = vector.broadcast %17 : vector<8x1xf32> to vector<8x512xf32>
    %28 = arith.subf %13, %27 : vector<8x512xf32>
    %cst_10 = arith.constant 9.99999974E-6 : f32
    %29 = vector.broadcast %cst_10 : f32 to vector<8x1xf32>
    %30 = arith.addf %26, %29 : vector<8x1xf32>
    %31 = math.rsqrt %30 : vector<8x1xf32>
    %32 = vector.broadcast %31 : vector<8x1xf32> to vector<8x512xf32>
    %33 = arith.mulf %28, %32 : vector<8x512xf32>
    %cst_11 = arith.constant 2.000000e-01 : f32
    %34 = vector.broadcast %cst_11 : f32 to vector<8x512xf32>
    %35 = arith.mulf %34, %33 : vector<8x512xf32>
    %36 = arith.maximumf %33, %35 : vector<8x512xf32>
    %c0_12 = arith.constant 0 : index
    %c0_13 = arith.constant 0 : index
    %37 = vector.load %arg4[%c0_12, %c0_13] : memref<8x72xf32, #tpu.memory_space<vmem>>, vector<8x72xf32>
    %c0_14 = arith.constant 0 : index
    %c0_15 = arith.constant 0 : index
    %38 = vector.load %arg5[%c0_14, %c0_15] : memref<72x512xf32, #tpu.memory_space<vmem>>, vector<72x512xf32>
    %c17_i32_16 = arith.constant 17 : i32
    %39 = tpu.dynamic_rotate %36 by %c17_i32_16 dim 1 : vector<8x512xf32>, i32 -> vector<8x512xf32>
    %c16_i32_17 = arith.constant 16 : i32
    %40 = tpu.dynamic_rotate %36 by %c16_i32_17 dim 1 : vector<8x512xf32>, i32 -> vector<8x512xf32>
    %c15_i32_18 = arith.constant 15 : i32
    %41 = tpu.dynamic_rotate %36 by %c15_i32_18 dim 1 : vector<8x512xf32>, i32 -> vector<8x512xf32>
    %c1_i32_19 = arith.constant 1 : i32
    %42 = tpu.dynamic_rotate %36 by %c1_i32_19 dim 1 : vector<8x512xf32>, i32 -> vector<8x512xf32>
    %c511_i32_20 = arith.constant 511 : i32
    %43 = tpu.dynamic_rotate %36 by %c511_i32_20 dim 1 : vector<8x512xf32>, i32 -> vector<8x512xf32>
    %c497_i32_21 = arith.constant 497 : i32
    %44 = tpu.dynamic_rotate %36 by %c497_i32_21 dim 1 : vector<8x512xf32>, i32 -> vector<8x512xf32>
    %c496_i32_22 = arith.constant 496 : i32
    %45 = tpu.dynamic_rotate %36 by %c496_i32_22 dim 1 : vector<8x512xf32>, i32 -> vector<8x512xf32>
    %c495_i32_23 = arith.constant 495 : i32
    %46 = tpu.dynamic_rotate %36 by %c495_i32_23 dim 1 : vector<8x512xf32>, i32 -> vector<8x512xf32>
    %47 = tpu.concatenate %39, %40, %41, %42, %36, %43, %44, %45, %46 in 0 : vector<8x512xf32>, vector<8x512xf32>, vector<8x512xf32>, vector<8x512xf32>, vector<8x512xf32>, vector<8x512xf32>, vector<8x512xf32>, vector<8x512xf32>, vector<8x512xf32> -> vector<72x512xf32>
    %48 = arith.mulf %47, %38 : vector<72x512xf32>
    %cst_24 = arith.constant dense<0.000000e+00> : vector<8x512xf32>
    %49 = tpu.matmul %37, %48, %cst_24 {dimension_numbers = #tpu.dot_dimension_numbers<[1], [0], [0], [1], [0, 0, 1, 1], [], []>} : vector<8x72xf32>, vector<72x512xf32>, vector<8x512xf32> -> vector<8x512xf32>
    %cst_25 = arith.constant dense<0.000000e+00> : vector<8xf32>
    %50 = vector.multi_reduction <add>, %49, %cst_25 [1] : vector<8x512xf32> to vector<8xf32>
    %51 = vector.shape_cast %50 : vector<8xf32> to vector<8x1xf32>
    %cst_26 = arith.constant 0.001953125 : f32
    %52 = vector.broadcast %cst_26 : f32 to vector<8x1xf32>
    %53 = arith.mulf %51, %52 : vector<8x1xf32>
    %54 = arith.mulf %49, %49 : vector<8x512xf32>
    %cst_27 = arith.constant dense<0.000000e+00> : vector<8xf32>
    %55 = vector.multi_reduction <add>, %54, %cst_27 [1] : vector<8x512xf32> to vector<8xf32>
    %56 = vector.shape_cast %55 : vector<8xf32> to vector<8x1xf32>
    %cst_28 = arith.constant 0.001953125 : f32
    %57 = vector.broadcast %cst_28 : f32 to vector<8x1xf32>
    %58 = arith.mulf %56, %57 : vector<8x1xf32>
    %59 = arith.mulf %53, %53 : vector<8x1xf32>
    %60 = arith.subf %58, %59 : vector<8x1xf32>
    %cst_29 = arith.constant 0.000000e+00 : f32
    %61 = vector.broadcast %cst_29 : f32 to vector<8x1xf32>
    %62 = arith.maximumf %60, %61 : vector<8x1xf32>
    %63 = vector.broadcast %53 : vector<8x1xf32> to vector<8x512xf32>
    %64 = arith.subf %49, %63 : vector<8x512xf32>
    %cst_30 = arith.constant 9.99999974E-6 : f32
    %65 = vector.broadcast %cst_30 : f32 to vector<8x1xf32>
    %66 = arith.addf %62, %65 : vector<8x1xf32>
    %67 = math.rsqrt %66 : vector<8x1xf32>
    %68 = vector.broadcast %67 : vector<8x1xf32> to vector<8x512xf32>
    %69 = arith.mulf %64, %68 : vector<8x512xf32>
    %cst_31 = arith.constant 2.000000e-01 : f32
    %70 = vector.broadcast %cst_31 : f32 to vector<8x512xf32>
    %71 = arith.mulf %70, %69 : vector<8x512xf32>
    %72 = arith.maximumf %69, %71 : vector<8x512xf32>
    %c0_32 = arith.constant 0 : index
    %c0_33 = arith.constant 0 : index
    %73 = vector.load %arg6[%c0_32, %c0_33] : memref<8x512xf32, #tpu.memory_space<vmem>>, vector<8x512xf32>
    tpu.vector_store %arg6[%c0_32, %c0_33], %72 {strides = array<i32>} : memref<8x512xf32, #tpu.memory_space<vmem>>, vector<8x512xf32>,
    return
  }
  func.func @transform_0(%arg0: i32) -> (i32, i32) {
    %c0_i32 = arith.constant 0 : i32
    %c0_i32_0 = arith.constant 0 : i32
    %c0_i32_1 = arith.constant 0 : i32
    return %c0_i32, %c0_i32_0 : i32, i32
  }
  func.func @transform_1(%arg0: i32) -> (i32, i32) {
    %c0_i32 = arith.constant 0 : i32
    %c0_i32_0 = arith.constant 0 : i32
    %c0_i32_1 = arith.constant 0 : i32
    return %c0_i32, %c0_i32_0 : i32, i32
  }
  func.func @transform_2(%arg0: i32) -> (i32, i32) {
    %c0_i32 = arith.constant 0 : i32
    %c0_i32_0 = arith.constant 0 : i32
    %c0_i32_1 = arith.constant 0 : i32
    return %c0_i32, %c0_i32_0 : i32, i32
  }
  func.func @transform_3(%arg0: i32) -> (i32, i32) {
    %c0_i32 = arith.constant 0 : i32
    %c0_i32_0 = arith.constant 0 : i32
    %c0_i32_1 = arith.constant 0 : i32
    return %c0_i32, %c0_i32_0 : i32, i32
  }
  func.func @transform_4(%arg0: i32) -> (i32, i32) {
    %c0_i32 = arith.constant 0 : i32
    %c0_i32_0 = arith.constant 0 : i32
    %c0_i32_1 = arith.constant 0 : i32
    return %c0_i32, %c0_i32_0 : i32, i32
  }
  func.func @transform_5(%arg0: i32) -> (i32, i32) {
    %c0_i32 = arith.constant 0 : i32
    %c0_i32_0 = arith.constant 0 : i32
    %c0_i32_1 = arith.constant 0 : i32
    return %c0_i32, %c0_i32_0 : i32, i32
  }
}

</mosaic_0001>

<llo_original>
// kernel: conv_module_forward.1
$region0: #{conv_module_forward.1}
  #allocation0 [shape = 'u32[]', space=smem, size = 0x4, offset = 0x4, fixed_abs, tag = 'smem constant byte address 0x4 - core index']
  #allocation1 [shape = 'u32[72,128]{1,0:T(1,128)}', space=vmem, size = 0x9000, scoped, tag = 'internal scratch']
  %s0 = inlined_call_operand.vmem [shape: f32[8,512], index: 0, kind: input, shape index: {}]
  %s1 = inlined_call_operand.vmem [shape: f32[8,72], index: 1, kind: input, shape index: {}]
  %s2 = inlined_call_operand.vmem [shape: f32[72,512], index: 2, kind: input, shape index: {}, may-alias: {2,4}]
  %s3 = inlined_call_operand.vmem [shape: f32[8,72], index: 3, kind: input, shape index: {}]
  %s4 = inlined_call_operand.vmem [shape: f32[72,512], index: 4, kind: input, shape index: {}, may-alias: {2,4}]
  %s5 = inlined_call_operand.vmem [shape: f32[8,512], index: 5, kind: output, shape index: {}]
  %s6 = sld [smem:[#allocation0]]
  $region30: #{conv_module_forward.1} parent=0
    _
  %s8 = ssub.s32 1, %s6
  %s9 = scalar_select 0, %s8, %s6
  // Predicated region
  $region2: #{conv_module_forward.1} parent=0 // pred_check
    _
  $region3: #{conv_module_forward.1} parent=0 // pred_check_branch
    %11 = sbr.rel (0) target = $region5
  $region4: #{conv_module_forward.1} parent=0 // pred_region
    _
  $region5: #{conv_module_forward.1} parent=0 // pred_fallthru
    _
  // Predicated region
  $region6: #{conv_module_forward.1} parent=0 // pred_check
    _
  $region7: #{conv_module_forward.1} parent=0 // pred_check_branch
    %13 = sbr.rel (0) target = $region9
  $region8: #{conv_module_forward.1} parent=0 // pred_region
    _
  $region9: #{conv_module_forward.1} parent=0 // pred_fallthru
    _
  // Predicated region
  $region10: #{conv_module_forward.1} parent=0 // pred_check
    _
  $region11: #{conv_module_forward.1} parent=0 // pred_check_branch
    %15 = sbr.rel (0) target = $region13
  $region12: #{conv_module_forward.1} parent=0 // pred_region
    _
  $region13: #{conv_module_forward.1} parent=0 // pred_fallthru
    _
  // Predicated region
  $region14: #{conv_module_forward.1} parent=0 // pred_check
    _
  $region15: #{conv_module_forward.1} parent=0 // pred_check_branch
    %17 = sbr.rel (0) target = $region17
  $region16: #{conv_module_forward.1} parent=0 // pred_region
    _
  $region17: #{conv_module_forward.1} parent=0 // pred_fallthru
    _
  // Predicated region
  $region18: #{conv_module_forward.1} parent=0 // pred_check
    _
  $region19: #{conv_module_forward.1} parent=0 // pred_check_branch
    %19 = sbr.rel (0) target = $region21
  $region20: #{conv_module_forward.1} parent=0 // pred_region
    _
  $region21: #{conv_module_forward.1} parent=0 // pred_fallthru
    _
  %v20 = vld [vmem:[%s0] sm:$0xff]
  %v21 = vld [vmem:[%s0 + $0x8] sm:$0xff]
  %v22 = vld [vmem:[%s0 + $0x10] sm:$0xff]
  %v23 = vld [vmem:[%s0 + $0x18] sm:$0xff]
  %v24 = vld [vmem:[%s1] sm:$0xff]
  %v25 = vld [vmem:[%s2] sm:$0xff]
  %v26 = vld [vmem:[%s2 + $0x8] sm:$0xff]
  %v27 = vld [vmem:[%s2 + $0x10] sm:$0xff]
  %v28 = vld [vmem:[%s2 + $0x18] sm:$0xff]
  %v29 = vld [vmem:[%s2 + $0x20] sm:$0xff]
  %v30 = vld [vmem:[%s2 + $0x28] sm:$0xff]
  %v31 = vld [vmem:[%s2 + $0x30] sm:$0xff]
  %v32 = vld [vmem:[%s2 + $0x38] sm:$0xff]
  %v33 = vld [vmem:[%s2 + $0x40] sm:$0xff]
  %v34 = vld [vmem:[%s2 + $0x48] sm:$0xff]
  %v35 = vld [vmem:[%s2 + $0x50] sm:$0xff]
  %v36 = vld [vmem:[%s2 + $0x58] sm:$0xff]
  %v37 = vld [vmem:[%s2 + $0x60] sm:$0xff]
  %v38 = vld [vmem:[%s2 + $0x68] sm:$0xff]
  %v39 = vld [vmem:[%s2 + $0x70] sm:$0xff]
  %v40 = vld [vmem:[%s2 + $0x78] sm:$0xff]
  %v41 = vld [vmem:[%s2 + $0x80] sm:$0xff]
  %v42 = vld [vmem:[%s2 + $0x88] sm:$0xff]
  %v43 = vld [vmem:[%s2 + $0x90] sm:$0xff]
  %v44 = vld [vmem:[%s2 + $0x98] sm:$0xff]
  %v45 = vld [vmem:[%s2 + $0xa0] sm:$0xff]
  %v46 = vld [vmem:[%s2 + $0xa8] sm:$0xff]
  %v47 = vld [vmem:[%s2 + $0xb0] sm:$0xff]
  %v48 = vld [vmem:[%s2 + $0xb8] sm:$0xff]
  %v49 = vld [vmem:[%s2 + $0xc0] sm:$0xff]
  %v50 = vld [vmem:[%s2 + $0xc8] sm:$0xff]
  %v51 = vld [vmem:[%s2 + $0xd0] sm:$0xff]
  %v52 = vld [vmem:[%s2 + $0xd8] sm:$0xff]
  %v53 = vld [vmem:[%s2 + $0xe0] sm:$0xff]
  %v54 = vld [vmem:[%s2 + $0xe8] sm:$0xff]
  %v55 = vld [vmem:[%s2 + $0xf0] sm:$0xff]
  %v56 = vld [vmem:[%s2 + $0xf8] sm:$0xff]
  %v57 = vld [vmem:[%s2 + $0x100] sm:$0xff]
  %v58 = vld [vmem:[%s2 + $0x108] sm:$0xff]
  %v59 = vld [vmem:[%s2 + $0x110] sm:$0xff]
  %v60 = vld [vmem:[%s2 + $0x118] sm:$0xff]
  %61 = vrot.lane.b32.xlu0 %v20, 17
  %v62 = vpop.permute.xlu0 %61
  %63 = vrot.lane.b32.xlu0 %v21, 17
  %v64 = vpop.permute.xlu0 %63
  %65 = vrot.lane.b32.xlu0 %v22, 17
  %v66 = vpop.permute.xlu0 %65
  %67 = vrot.lane.b32.xlu0 %v23, 17
  %v68 = vpop.permute.xlu0 %67
  %v69 = vlaneseq
  %v70 = vand.u32 %v69, 127
  %vm71 = vcmp.lt.s32.totalorder %v70, 17
  %v72 = vsel %vm71, %v66, %v68
  %v73 = vsel %vm71, %v64, %v66
  %v74 = vsel %vm71, %v62, %v64
  %v75 = vsel %vm71, %v68, %v62
  %76 = vrot.lane.b32.xlu0 %v20, 16
  %v77 = vpop.permute.xlu0 %76
  %78 = vrot.lane.b32.xlu0 %v21, 16
  %v79 = vpop.permute.xlu0 %78
  %80 = vrot.lane.b32.xlu0 %v22, 16
  %v81 = vpop.permute.xlu0 %80
  %82 = vrot.lane.b32.xlu0 %v23, 16
  %v83 = vpop.permute.xlu0 %82
  %vm84 = vcmp.lt.s32.totalorder %v70, 16
  %v85 = vsel %vm84, %v81, %v83
  %v86 = vsel %vm84, %v79, %v81
  %v87 = vsel %vm84, %v77, %v79
  %v88 = vsel %vm84, %v83, %v77
  %89 = vrot.lane.b32.xlu0 %v20, 15
  %v90 = vpop.permute.xlu0 %89
  %91 = vrot.lane.b32.xlu0 %v21, 15
  %v92 = vpop.permute.xlu0 %91
  %93 = vrot.lane.b32.xlu0 %v22, 15
  %v94 = vpop.permute.xlu0 %93
  %95 = vrot.lane.b32.xlu0 %v23, 15
  %v96 = vpop.permute.xlu0 %95
  %vm97 = vcmp.lt.s32.totalorder %v70, 15
  %v98 = vsel %vm97, %v94, %v96
  %v99 = vsel %vm97, %v92, %v94
  %v100 = vsel %vm97, %v90, %v92
  %v101 = vsel %vm97, %v96, %v90
  %102 = vrot.lane.b32.xlu0 %v20, 1
  %v103 = vpop.permute.xlu0 %102
  %104 = vrot.lane.b32.xlu0 %v21, 1
  %v105 = vpop.permute.xlu0 %104
  %106 = vrot.lane.b32.xlu0 %v22, 1
  %v107 = vpop.permute.xlu0 %106
  %108 = vrot.lane.b32.xlu0 %v23, 1
  %v109 = vpop.permute.xlu0 %108
  %vm110 = vcmp.lt.s32.totalorder %v70, 1
  %v111 = vsel %vm110, %v107, %v109
  %v112 = vsel %vm110, %v105, %v107
  %v113 = vsel %vm110, %v103, %v105
  %v114 = vsel %vm110, %v109, %v103
  %115 = vrot.lane.b32.xlu0 %v20, 127
  %v116 = vpop.permute.xlu0 %115
  %117 = vrot.lane.b32.xlu0 %v21, 127
  %v118 = vpop.permute.xlu0 %117
  %119 = vrot.lane.b32.xlu0 %v22, 127
  %v120 = vpop.permute.xlu0 %119
  %121 = vrot.lane.b32.xlu0 %v23, 127
  %v122 = vpop.permute.xlu0 %121
  %vm123 = vcmp.lt.s32.totalorder %v70, 127
  %v124 = vsel %vm123, %v120, %v122
  %v125 = vsel %vm123, %v118, %v120
  %v126 = vsel %vm123, %v116, %v118
  %v127 = vsel %vm123, %v122, %v116
  %128 = vrot.lane.b32.xlu0 %v20, 113
  %v129 = vpop.permute.xlu0 %128
  %130 = vrot.lane.b32.xlu0 %v21, 113
  %v131 = vpop.permute.xlu0 %130
  %132 = vrot.lane.b32.xlu0 %v22, 113
  %v133 = vpop.permute.xlu0 %132
  %134 = vrot.lane.b32.xlu0 %v23, 113
  %v135 = vpop.permute.xlu0 %134
  %vm136 = vcmp.lt.s32.totalorder %v70, 113
  %v137 = vsel %vm136, %v133, %v135
  %v138 = vsel %vm136, %v131, %v133
  %v139 = vsel %vm136, %v129, %v131
  %v140 = vsel %vm136, %v135, %v129
  %141 = vrot.lane.b32.xlu0 %v20, 112
  %v142 = vpop.permute.xlu0 %141
  %143 = vrot.lane.b32.xlu0 %v21, 112
  %v144 = vpop.permute.xlu0 %143
  %145 = vrot.lane.b32.xlu0 %v22, 112
  %v146 = vpop.permute.xlu0 %145
  %147 = vrot.lane.b32.xlu0 %v23, 112
  %v148 = vpop.permute.xlu0 %147
  %vm149 = vcmp.lt.s32.totalorder %v70, 112
  %v150 = vsel %vm149, %v146, %v148
  %v151 = vsel %vm149, %v144, %v146
  %v152 = vsel %vm149, %v142, %v144
  %v153 = vsel %vm149, %v148, %v142
  %154 = vrot.lane.b32.xlu0 %v20, 111
  %v155 = vpop.permute.xlu0 %154
  %156 = vrot.lane.b32.xlu0 %v21, 111
  %v157 = vpop.permute.xlu0 %156
  %158 = vrot.lane.b32.xlu0 %v22, 111
  %v159 = vpop.permute.xlu0 %158
  %160 = vrot.lane.b32.xlu0 %v23, 111
  %v161 = vpop.permute.xlu0 %160
  %vm162 = vcmp.lt.s32.totalorder %v70, 111
  %v163 = vsel %vm162, %v159, %v161
  %v164 = vsel %vm162, %v157, %v159
  %v165 = vsel %vm162, %v155, %v157
  %v166 = vsel %vm162, %v161, %v155
  %v167 = vmul.f32 %v75, %v25
  %v168 = vmul.f32 %v74, %v26
  %v169 = vmul.f32 %v73, %v27
  %v170 = vmul.f32 %v72, %v28
  %v171 = vmul.f32 %v88, %v29
  %v172 = vmul.f32 %v87, %v30
  %v173 = vmul.f32 %v86, %v31
  %v174 = vmul.f32 %v85, %v32
  %v175 = vmul.f32 %v101, %v33
  %v176 = vmul.f32 %v100, %v34
  %v177 = vmul.f32 %v99, %v35
  %v178 = vmul.f32 %v98, %v36
  %v179 = vmul.f32 %v114, %v37
  %v180 = vmul.f32 %v113, %v38
  %v181 = vmul.f32 %v112, %v39
  %v182 = vmul.f32 %v111, %v40
  %v183 = vmul.f32 %v20, %v41
  %v184 = vmul.f32 %v21, %v42
  %v185 = vmul.f32 %v22, %v43
  %v186 = vmul.f32 %v23, %v44
  %v187 = vmul.f32 %v126, %v45
  %v188 = vmul.f32 %v125, %v46
  %v189 = vmul.f32 %v124, %v47
  %v190 = vmul.f32 %v127, %v48
  %v191 = vmul.f32 %v139, %v49
  %v192 = vmul.f32 %v138, %v50
  %v193 = vmul.f32 %v137, %v51
  %v194 = vmul.f32 %v140, %v52
  %v195 = vmul.f32 %v152, %v53
  %v196 = vmul.f32 %v151, %v54
  %v197 = vmul.f32 %v150, %v55
  %v198 = vmul.f32 %v153, %v56
  %v199 = vmul.f32 %v165, %v57
  %v200 = vmul.f32 %v164, %v58
  %v201 = vmul.f32 %v163, %v59
  %v202 = vmul.f32 %v166, %v60
  %vm203 = vcmask 588800
  %v205 = vsel %vm203, %v24, 0
  %207 = vmatpush.msra.mxu0 0.0
  %208 = vmatpush.msra.mxu0 0.0
  %209 = vmatpush.msra.mxu0 0.0
  %210 = vmatpush.msra.mxu0 0.0
  %211 = vmatpush.msra.mxu0 0.0
  %212 = vmatpush.msra.mxu0 0.0
  %213 = vmatpush.msra.mxu0 0.0
  %214 = vmatpush.msra.mxu0 %v199
  %215 = vmatpush.msra.mxu0 %v195
  %216 = vmatpush.msra.mxu0 %v191
  %217 = vmatpush.msra.mxu0 %v187
  %218 = vmatpush.msra.mxu0 %v183
  %219 = vmatpush.msra.mxu0 %v179
  %220 = vmatpush.msra.mxu0 %v175
  %221 = vmatpush.msra.mxu0 %v171
  %222 = vmatpush.msra.mxu0 %v167
  %223 = vmatmul.f32.gmra.mxu0 %v205
  %v224 = vpop.f32.mrf.mxu0
  %v225 = vadd.f32 0.0, %v224
  %226 = vdwg.mxu0
  %227 = vmatpush.msra.mxu0 0.0
  %228 = vmatpush.msra.mxu0 0.0
  %229 = vmatpush.msra.mxu0 0.0
  %230 = vmatpush.msra.mxu0 0.0
  %231 = vmatpush.msra.mxu0 0.0
  %232 = vmatpush.msra.mxu0 0.0
  %233 = vmatpush.msra.mxu0 0.0
  %234 = vmatpush.msra.mxu0 %v200
  %235 = vmatpush.msra.mxu0 %v196
  %236 = vmatpush.msra.mxu0 %v192
  %237 = vmatpush.msra.mxu0 %v188
  %238 = vmatpush.msra.mxu0 %v184
  %239 = vmatpush.msra.mxu0 %v180
  %240 = vmatpush.msra.mxu0 %v176
  %241 = vmatpush.msra.mxu0 %v172
  %242 = vmatpush.msra.mxu0 %v168
  %243 = vmatmul.f32.gmra.mxu0 %v205
  %v244 = vpop.f32.mrf.mxu0
  %v245 = vadd.f32 0.0, %v244
  %246 = vdwg.mxu0
  %247 = vmatpush.msra.mxu0 0.0
  %248 = vmatpush.msra.mxu0 0.0
  %249 = vmatpush.msra.mxu0 0.0
  %250 = vmatpush.msra.mxu0 0.0
  %251 = vmatpush.msra.mxu0 0.0
  %252 = vmatpush.msra.mxu0 0.0
  %253 = vmatpush.msra.mxu0 0.0
  %254 = vmatpush.msra.mxu0 %v201
  %255 = vmatpush.msra.mxu0 %v197
  %256 = vmatpush.msra.mxu0 %v193
  %257 = vmatpush.msra.mxu0 %v189
  %258 = vmatpush.msra.mxu0 %v185
  %259 = vmatpush.msra.mxu0 %v181
  %260 = vmatpush.msra.mxu0 %v177
  %261 = vmatpush.msra.mxu0 %v173
  %262 = vmatpush.msra.mxu0 %v169
  %263 = vmatmul.f32.gmra.mxu0 %v205
  %v264 = vpop.f32.mrf.mxu0
  %v265 = vadd.f32 0.0, %v264
  %266 = vdwg.mxu0
  %267 = vmatpush.msra.mxu0 0.0
  %268 = vmatpush.msra.mxu0 0.0
  %269 = vmatpush.msra.mxu0 0.0
  %270 = vmatpush.msra.mxu0 0.0
  %271 = vmatpush.msra.mxu0 0.0
  %272 = vmatpush.msra.mxu0 0.0
  %273 = vmatpush.msra.mxu0 0.0
  %274 = vmatpush.msra.mxu0 %v202
  %275 = vmatpush.msra.mxu0 %v198
  %276 = vmatpush.msra.mxu0 %v194
  %277 = vmatpush.msra.mxu0 %v190
  %278 = vmatpush.msra.mxu0 %v186
  %279 = vmatpush.msra.mxu0 %v182
  %280 = vmatpush.msra.mxu0 %v178
  %281 = vmatpush.msra.mxu0 %v174
  %282 = vmatpush.msra.mxu0 %v170
  %283 = vmatmul.f32.gmra.mxu0 %v205
  %v284 = vpop.f32.mrf.mxu0
  %v285 = vadd.f32 0.0, %v284
  %286 = vdwg.mxu0
  %v287 = vadd.f32 %v225, %v245
  %v288 = vadd.f32 %v287, %v265
  %v289 = vadd.f32 %v288, %v285
  %290 = vadd.xlane.f32.xlu0 %v289
  %v291 = vpop.xlane.xlu0 %290
  %v292 = vmul.f32 %v291, 0.001953125
  %v293 = vmul.f32 %v225, %v225
  %v294 = vmul.f32 %v245, %v245
  %v295 = vmul.f32 %v265, %v265
  %v296 = vmul.f32 %v285, %v285
  %v297 = vadd.f32 %v293, %v294
  %v298 = vadd.f32 %v297, %v295
  %v299 = vadd.f32 %v298, %v296
  %300 = vadd.xlane.f32.xlu0 %v299
  %v301 = vpop.xlane.xlu0 %300
  %v302 = vmul.f32 %v301, 0.001953125
  %v303 = vmul.f32 %v292, %v292
  %v304 = vsub.f32 %v302, %v303
  %v305 = vmax.f32 %v304, 0.0
  %v306 = vsub.f32 %v225, %v292
  %v307 = vsub.f32 %v245, %v292
  %v308 = vsub.f32 %v265, %v292
  %v309 = vsub.f32 %v285, %v292
  %v310 = vadd.f32 %v305, 1e-05
  %v311 = vrsqrt.pop %v310
  %v312 = vmul.f32 %v311, %v310
  %v313 = vmul.f32 %v312, %v311
  %v314 = vmul.f32 0.5, %v313
  %v315 = vsub.f32 1.5, %v314
  %v316 = vmul.f32 %v311, %v315
  %vm317 = vweird.f32 %v310
  %vm318 = vweird.f32 %v311
  %vm319 = vmor %vm317, %vm318
  %v320 = vsel %vm319, %v311, %v316
  %v321 = vmul.f32 %v306, %v320
  %v322 = vmul.f32 %v307, %v320
  %v323 = vmul.f32 %v308, %v320
  %v324 = vmul.f32 %v309, %v320
  %v325 = vmul.f32 %v321, 0.2
  %v326 = vmul.f32 %v322, 0.2
  %v327 = vmul.f32 %v323, 0.2
  %v328 = vmul.f32 %v324, 0.2
  %v329 = vmax.f32 %v321, %v325
  %v330 = vmax.f32 %v322, %v326
  %v331 = vmax.f32 %v323, %v327
  %v332 = vmax.f32 %v324, %v328
  %v333 = vld [vmem:[%s3] sm:$0xff]
  %v334 = vld [vmem:[%s4] sm:$0xff]
  %v335 = vld [vmem:[%s4 + $0x8] sm:$0xff]
  %v336 = vld [vmem:[%s4 + $0x10] sm:$0xff]
  %v337 = vld [vmem:[%s4 + $0x18] sm:$0xff]
  %v338 = vld [vmem:[%s4 + $0x20] sm:$0xff]
  %v339 = vld [vmem:[%s4 + $0x28] sm:$0xff]
  %v340 = vld [vmem:[%s4 + $0x30] sm:$0xff]
  %v341 = vld [vmem:[%s4 + $0x38] sm:$0xff]
  %v342 = vld [vmem:[%s4 + $0x40] sm:$0xff]
  %v343 = vld [vmem:[%s4 + $0x48] sm:$0xff]
  %v344 = vld [vmem:[%s4 + $0x50] sm:$0xff]
  %v345 = vld [vmem:[%s4 + $0x58] sm:$0xff]
  %v346 = vld [vmem:[%s4 + $0x60] sm:$0xff]
  %v347 = vld [vmem:[%s4 + $0x68] sm:$0xff]
  %v348 = vld [vmem:[%s4 + $0x70] sm:$0xff]
  %v349 = vld [vmem:[%s4 + $0x78] sm:$0xff]
  %v350 = vld [vmem:[%s4 + $0x80] sm:$0xff]
  %v351 = vld [vmem:[%s4 + $0x88] sm:$0xff]
  %v352 = vld [vmem:[%s4 + $0x90] sm:$0xff]
  %v353 = vld [vmem:[%s4 + $0x98] sm:$0xff]
  %v354 = vld [vmem:[%s4 + $0xa0] sm:$0xff]
  %v355 = vld [vmem:[%s4 + $0xa8] sm:$0xff]
  %v356 = vld [vmem:[%s4 + $0xb0] sm:$0xff]
  %v357 = vld [vmem:[%s4 + $0xb8] sm:$0xff]
  %v358 = vld [vmem:[%s4 + $0xc0] sm:$0xff]
  %v359 = vld [vmem:[%s4 + $0xc8] sm:$0xff]
  %v360 = vld [vmem:[%s4 + $0xd0] sm:$0xff]
  %v361 = vld [vmem:[%s4 + $0xd8] sm:$0xff]
  %v362 = vld [vmem:[%s4 + $0xe0] sm:$0xff]
  %v363 = vld [vmem:[%s4 + $0xe8] sm:$0xff]
  %v364 = vld [vmem:[%s4 + $0xf0] sm:$0xff]
  %v365 = vld [vmem:[%s4 + $0xf8] sm:$0xff]
  %v366 = vld [vmem:[%s4 + $0x100] sm:$0xff]
  %v367 = vld [vmem:[%s4 + $0x108] sm:$0xff]
  %v368 = vld [vmem:[%s4 + $0x110] sm:$0xff]
  %v369 = vld [vmem:[%s4 + $0x118] sm:$0xff]
  %370 = vrot.lane.b32.xlu0 %v329, 17
  %v371 = vpop.permute.xlu0 %370
  %372 = vrot.lane.b32.xlu0 %v330, 17
  %v373 = vpop.permute.xlu0 %372
  %374 = vrot.lane.b32.xlu0 %v331, 17
  %v375 = vpop.permute.xlu0 %374
  %376 = vrot.lane.b32.xlu0 %v332, 17
  %v377 = vpop.permute.xlu0 %376
  %v378 = vsel %vm71, %v375, %v377
  %v379 = vsel %vm71, %v373, %v375
  %v380 = vsel %vm71, %v371, %v373
  %v381 = vsel %vm71, %v377, %v371
  %382 = vrot.lane.b32.xlu0 %v329, 16
  %v383 = vpop.permute.xlu0 %382
  %384 = vrot.lane.b32.xlu0 %v330, 16
  %v385 = vpop.permute.xlu0 %384
  %386 = vrot.lane.b32.xlu0 %v331, 16
  %v387 = vpop.permute.xlu0 %386
  %388 = vrot.lane.b32.xlu0 %v332, 16
  %v389 = vpop.permute.xlu0 %388
  %v390 = vsel %vm84, %v387, %v389
  %v391 = vsel %vm84, %v385, %v387
  %v392 = vsel %vm84, %v383, %v385
  %v393 = vsel %vm84, %v389, %v383
  %394 = vrot.lane.b32.xlu0 %v329, 15
  %v395 = vpop.permute.xlu0 %394
  %396 = vrot.lane.b32.xlu0 %v330, 15
  %v397 = vpop.permute.xlu0 %396
  %398 = vrot.lane.b32.xlu0 %v331, 15
  %v399 = vpop.permute.xlu0 %398
  %400 = vrot.lane.b32.xlu0 %v332, 15
  %v401 = vpop.permute.xlu0 %400
  %v402 = vsel %vm97, %v399, %v401
  %v403 = vsel %vm97, %v397, %v399
  %v404 = vsel %vm97, %v395, %v397
  %v405 = vsel %vm97, %v401, %v395
  %406 = vrot.lane.b32.xlu0 %v329, 1
  %v407 = vpop.permute.xlu0 %406
  %408 = vrot.lane.b32.xlu0 %v330, 1
  %v409 = vpop.permute.xlu0 %408
  %410 = vrot.lane.b32.xlu0 %v331, 1
  %v411 = vpop.permute.xlu0 %410
  %412 = vrot.lane.b32.xlu0 %v332, 1
  %v413 = vpop.permute.xlu0 %412
  %v414 = vsel %vm110, %v411, %v413
  %v415 = vsel %vm110, %v409, %v411
  %v416 = vsel %vm110, %v407, %v409
  %v417 = vsel %vm110, %v413, %v407
  %418 = vrot.lane.b32.xlu0 %v329, 127
  %v419 = vpop.permute.xlu0 %418
  %420 = vrot.lane.b32.xlu0 %v330, 127
  %v421 = vpop.permute.xlu0 %420
  %422 = vrot.lane.b32.xlu0 %v331, 127
  %v423 = vpop.permute.xlu0 %422
  %424 = vrot.lane.b32.xlu0 %v332, 127
  %v425 = vpop.permute.xlu0 %424
  %v426 = vsel %vm123, %v423, %v425
  %v427 = vsel %vm123, %v421, %v423
  %v428 = vsel %vm123, %v419, %v421
  %v429 = vsel %vm123, %v425, %v419
  %430 = vrot.lane.b32.xlu0 %v329, 113
  %v431 = vpop.permute.xlu0 %430
  %432 = vrot.lane.b32.xlu0 %v330, 113
  %v433 = vpop.permute.xlu0 %432
  %434 = vrot.lane.b32.xlu0 %v331, 113
  %v435 = vpop.permute.xlu0 %434
  %436 = vrot.lane.b32.xlu0 %v332, 113
  %v437 = vpop.permute.xlu0 %436
  %v438 = vsel %vm136, %v435, %v437
  %v439 = vsel %vm136, %v433, %v435
  %v440 = vsel %vm136, %v431, %v433
  %v441 = vsel %vm136, %v437, %v431
  %442 = vrot.lane.b32.xlu0 %v329, 112
  %v443 = vpop.permute.xlu0 %442
  %444 = vrot.lane.b32.xlu0 %v330, 112
  %v445 = vpop.permute.xlu0 %444
  %446 = vrot.lane.b32.xlu0 %v331, 112
  %v447 = vpop.permute.xlu0 %446
  %448 = vrot.lane.b32.xlu0 %v332, 112
  %v449 = vpop.permute.xlu0 %448
  %v450 = vsel %vm149, %v447, %v449
  %v451 = vsel %vm149, %v445, %v447
  %v452 = vsel %vm149, %v443, %v445
  %v453 = vsel %vm149, %v449, %v443
  %454 = vrot.lane.b32.xlu0 %v329, 111
  %v455 = vpop.permute.xlu0 %454
  %456 = vrot.lane.b32.xlu0 %v330, 111
  %v457 = vpop.permute.xlu0 %456
  %458 = vrot.lane.b32.xlu0 %v331, 111
  %v459 = vpop.permute.xlu0 %458
  %460 = vrot.lane.b32.xlu0 %v332, 111
  %v461 = vpop.permute.xlu0 %460
  %v462 = vsel %vm162, %v459, %v461
  %v463 = vsel %vm162, %v457, %v459
  %v464 = vsel %vm162, %v455, %v457
  %v465 = vsel %vm162, %v461, %v455
  %v466 = vmul.f32 %v381, %v334
  %v467 = vmul.f32 %v380, %v335
  %v468 = vmul.f32 %v379, %v336
  %v469 = vmul.f32 %v378, %v337
  %v470 = vmul.f32 %v393, %v338
  %v471 = vmul.f32 %v392, %v339
  %v472 = vmul.f32 %v391, %v340
  %v473 = vmul.f32 %v390, %v341
  %v474 = vmul.f32 %v405, %v342
  %v475 = vmul.f32 %v404, %v343
  %v476 = vmul.f32 %v403, %v344
  %v477 = vmul.f32 %v402, %v345
  %v478 = vmul.f32 %v417, %v346
  %v479 = vmul.f32 %v416, %v347
  %v480 = vmul.f32 %v415, %v348
  %v481 = vmul.f32 %v414, %v349
  %v482 = vmul.f32 %v329, %v350
  %v483 = vmul.f32 %v330, %v351
  %v484 = vmul.f32 %v331, %v352
  %v485 = vmul.f32 %v332, %v353
  %v486 = vmul.f32 %v428, %v354
  %v487 = vmul.f32 %v427, %v355
  %v488 = vmul.f32 %v426, %v356
  %v489 = vmul.f32 %v429, %v357
  %v490 = vmul.f32 %v440, %v358
  %v491 = vmul.f32 %v439, %v359
  %v492 = vmul.f32 %v438, %v360
  %v493 = vmul.f32 %v441, %v361
  %v494 = vmul.f32 %v452, %v362
  %v495 = vmul.f32 %v451, %v363
  %v496 = vmul.f32 %v450, %v364
  %v497 = vmul.f32 %v453, %v365
  %v498 = vmul.f32 %v464, %v366
  %v499 = vmul.f32 %v463, %v367
  %v500 = vmul.f32 %v462, %v368
  %v501 = vmul.f32 %v465, %v369
  %v503 = vsel %vm203, %v333, 0
  %505 = vmatpush.msra.mxu0 0.0
  %506 = vmatpush.msra.mxu0 0.0
  %507 = vmatpush.msra.mxu0 0.0
  %508 = vmatpush.msra.mxu0 0.0
  %509 = vmatpush.msra.mxu0 0.0
  %510 = vmatpush.msra.mxu0 0.0
  %511 = vmatpush.msra.mxu0 0.0
  %512 = vmatpush.msra.mxu0 %v498
  %513 = vmatpush.msra.mxu0 %v494
  %514 = vmatpush.msra.mxu0 %v490
  %515 = vmatpush.msra.mxu0 %v486
  %516 = vmatpush.msra.mxu0 %v482
  %517 = vmatpush.msra.mxu0 %v478
  %518 = vmatpush.msra.mxu0 %v474
  %519 = vmatpush.msra.mxu0 %v470
  %520 = vmatpush.msra.mxu0 %v466
  %521 = vmatmul.f32.gmra.mxu0 %v503
  %v522 = vpop.f32.mrf.mxu0
  %v523 = vadd.f32 0.0, %v522
  %524 = vdwg.mxu0
  %525 = vmatpush.msra.mxu0 0.0
  %526 = vmatpush.msra.mxu0 0.0
  %527 = vmatpush.msra.mxu0 0.0
  %528 = vmatpush.msra.mxu0 0.0
  %529 = vmatpush.msra.mxu0 0.0
  %530 = vmatpush.msra.mxu0 0.0
  %531 = vmatpush.msra.mxu0 0.0
  %532 = vmatpush.msra.mxu0 %v499
  %533 = vmatpush.msra.mxu0 %v495
  %534 = vmatpush.msra.mxu0 %v491
  %535 = vmatpush.msra.mxu0 %v487
  %536 = vmatpush.msra.mxu0 %v483
  %537 = vmatpush.msra.mxu0 %v479
  %538 = vmatpush.msra.mxu0 %v475
  %539 = vmatpush.msra.mxu0 %v471
  %540 = vmatpush.msra.mxu0 %v467
  %541 = vmatmul.f32.gmra.mxu0 %v503
  %v542 = vpop.f32.mrf.mxu0
  %v543 = vadd.f32 0.0, %v542
  %544 = vdwg.mxu0
  %545 = vmatpush.msra.mxu0 0.0
  %546 = vmatpush.msra.mxu0 0.0
  %547 = vmatpush.msra.mxu0 0.0
  %548 = vmatpush.msra.mxu0 0.0
  %549 = vmatpush.msra.mxu0 0.0
  %550 = vmatpush.msra.mxu0 0.0
  %551 = vmatpush.msra.mxu0 0.0
  %552 = vmatpush.msra.mxu0 %v500
  %553 = vmatpush.msra.mxu0 %v496
  %554 = vmatpush.msra.mxu0 %v492
  %555 = vmatpush.msra.mxu0 %v488
  %556 = vmatpush.msra.mxu0 %v484
  %557 = vmatpush.msra.mxu0 %v480
  %558 = vmatpush.msra.mxu0 %v476
  %559 = vmatpush.msra.mxu0 %v472
  %560 = vmatpush.msra.mxu0 %v468
  %561 = vmatmul.f32.gmra.mxu0 %v503
  %v562 = vpop.f32.mrf.mxu0
  %v563 = vadd.f32 0.0, %v562
  %564 = vdwg.mxu0
  %565 = vmatpush.msra.mxu0 0.0
  %566 = vmatpush.msra.mxu0 0.0
  %567 = vmatpush.msra.mxu0 0.0
  %568 = vmatpush.msra.mxu0 0.0
  %569 = vmatpush.msra.mxu0 0.0
  %570 = vmatpush.msra.mxu0 0.0
  %571 = vmatpush.msra.mxu0 0.0
  %572 = vmatpush.msra.mxu0 %v501
  %573 = vmatpush.msra.mxu0 %v497
  %574 = vmatpush.msra.mxu0 %v493
  %575 = vmatpush.msra.mxu0 %v489
  %576 = vmatpush.msra.mxu0 %v485
  %577 = vmatpush.msra.mxu0 %v481
  %578 = vmatpush.msra.mxu0 %v477
  %579 = vmatpush.msra.mxu0 %v473
  %580 = vmatpush.msra.mxu0 %v469
  %581 = vmatmul.f32.gmra.mxu0 %v503
  %v582 = vpop.f32.mrf.mxu0
  %v583 = vadd.f32 0.0, %v582
  %584 = vdwg.mxu0
  %v585 = vadd.f32 %v523, %v543
  %v586 = vadd.f32 %v585, %v563
  %v587 = vadd.f32 %v586, %v583
  %588 = vadd.xlane.f32.xlu0 %v587
  %v589 = vpop.xlane.xlu0 %588
  %v590 = vmul.f32 %v589, 0.001953125
  %v591 = vmul.f32 %v523, %v523
  %v592 = vmul.f32 %v543, %v543
  %v593 = vmul.f32 %v563, %v563
  %v594 = vmul.f32 %v583, %v583
  %v595 = vadd.f32 %v591, %v592
  %v596 = vadd.f32 %v595, %v593
  %v597 = vadd.f32 %v596, %v594
  %598 = vadd.xlane.f32.xlu0 %v597
  %v599 = vpop.xlane.xlu0 %598
  %v600 = vmul.f32 %v599, 0.001953125
  %v601 = vmul.f32 %v590, %v590
  %v602 = vsub.f32 %v600, %v601
  %v603 = vmax.f32 %v602, 0.0
  %v604 = vsub.f32 %v523, %v590
  %v605 = vsub.f32 %v543, %v590
  %v606 = vsub.f32 %v563, %v590
  %v607 = vsub.f32 %v583, %v590
  %v608 = vadd.f32 %v603, 1e-05
  %v609 = vrsqrt.pop %v608
  %v610 = vmul.f32 %v609, %v608
  %v611 = vmul.f32 %v610, %v609
  %v612 = vmul.f32 0.5, %v611
  %v613 = vsub.f32 1.5, %v612
  %v614 = vmul.f32 %v609, %v613
  %vm615 = vweird.f32 %v608
  %vm616 = vweird.f32 %v609
  %vm617 = vmor %vm615, %vm616
  %v618 = vsel %vm617, %v609, %v614
  %v619 = vmul.f32 %v604, %v618
  %v620 = vmul.f32 %v605, %v618
  %v621 = vmul.f32 %v606, %v618
  %v622 = vmul.f32 %v607, %v618
  %v623 = vmul.f32 %v619, 0.2
  %v624 = vmul.f32 %v620, 0.2
  %v625 = vmul.f32 %v621, 0.2
  %v626 = vmul.f32 %v622, 0.2
  %v627 = vmax.f32 %v619, %v623
  %v628 = vmax.f32 %v620, %v624
  %v629 = vmax.f32 %v621, %v625
  %v630 = vmax.f32 %v622, %v626
  %631 = vst [vmem:[%s5] sm:$0xff] %v627
  %632 = vst [vmem:[%s5 + $0x8] sm:$0xff] %v628
  %633 = vst [vmem:[%s5 + $0x10] sm:$0xff] %v629
  %634 = vst [vmem:[%s5 + $0x18] sm:$0xff] %v630
  // Predicated region
  $region22: #{conv_module_forward.1} parent=0 // pred_check
    _
  $region23: #{conv_module_forward.1} parent=0 // pred_check_branch
    %636 = sbr.rel (0) target = $region25
  $region24: #{conv_module_forward.1} parent=0 // pred_region
    _
  $region25: #{conv_module_forward.1} parent=0 // pred_fallthru
    _
  // Predicated region
  $region26: #{conv_module_forward.1} parent=0 // pred_check
    _
  $region27: #{conv_module_forward.1} parent=0 // pred_check_branch
    %638 = sbr.rel (0) target = $region29
  $region28: #{conv_module_forward.1} parent=0 // pred_region
    _
  $region29: #{conv_module_forward.1} parent=0 // pred_fallthru
    _

</llo_original>
